<compile_context>
chip_gen: v5e
topology: v5e:2x2
jax: 0.10.0
libtpu: 0.0.40
codegen_flags: <defaults>
</compile_context>

<pallas_src>
import functools

import jax
import jax.numpy as jnp
from jax.experimental import pallas as pl
from jax.experimental.pallas import tpu as pltpu


def _sigmoid(z):
    # Explicit form lowers cleanly in Mosaic (EUP exp + VPU); stable for the
    # bounded pre-activations an SE gate sees.
    return 1.0 / (1.0 + jnp.exp(-z))


# --------------------------- fused per-image kernel ---------------------------


def _fused_kernel(x_ref, w1t_ref, w2_ref, o_ref, *, hw):
    # x_ref/o_ref: (1, C, HW); w1t_ref/w2_ref: (C, Cm), constant block -> resident.
    x = x_ref[...]
    # Global average pool (f32 accumulate), result (C, 1).
    pooled = jnp.sum(x.astype(jnp.float32), axis=-1, keepdims=True)[0] * (1.0 / hw)
    # fc1 + ReLU: h[0, m] = relu(sum_c pooled[c] * w1[m, c])  -> sublane reduce, (1, Cm).
    h = jnp.maximum(
        jnp.sum(w1t_ref[...].astype(jnp.float32) * pooled, axis=0, keepdims=True), 0.0)
    # fc2 + sigmoid: s[c] = sigmoid(sum_m w2[c, m] * h[m])    -> lane reduce, (C, 1).
    s = _sigmoid(jnp.sum(w2_ref[...].astype(jnp.float32) * h, axis=-1, keepdims=True))
    # Channel-wise rescale over the full image (single HBM read / write of x).
    o_ref[...] = (x * s[None, :, :].astype(x.dtype)).astype(o_ref.dtype)


# --------------------------- fallback two-pass kernels -------------------------


def _pool_kernel(x_ref, sum_ref, *, hw, tile):
    # x_ref: (1, C, tile); sum_ref: (1, C, 1) f32 accumulator resident over the
    # HW-tile ("arbitrary") grid axis.
    t = pl.program_id(1)

    @pl.when(t == 0)
    def _():
        sum_ref[...] = jnp.zeros_like(sum_ref)

    x = x_ref[...].astype(jnp.float32)
    if hw % tile:
        # Ragged final tile: mask out-of-range lanes (their contents are
        # unspecified padding) so the spatial sum stays exact.
        lane = jax.lax.broadcasted_iota(jnp.int32, x.shape, 2)
        x = jnp.where(t * tile + lane < hw, x, 0.0)
    sum_ref[...] += jnp.sum(x, axis=-1, keepdims=True)


def _rescale_kernel(x_ref, s_ref, o_ref):
    # Pure elementwise: ragged-tile OOB reads feed only OOB (discarded) writes.
    o_ref[...] = (x_ref[...] * s_ref[...].astype(x_ref.dtype)).astype(o_ref.dtype)


# ----------------------------------- wrapper ----------------------------------


def se_module(x, w1, w2, *, tile_bytes=4 << 20,
              vmem_limit_bytes=48 * 1024 * 1024, force_two_pass=False):
    """x: (N, C, H, W); w1: (C//r, C); w2: (C, C//r). Returns (N, C, H, W)."""
    N, C, H, W = x.shape
    Cm = w1.shape[0]
    HW = H * W
    itemsize = jnp.dtype(x.dtype).itemsize

    x_flat = x.reshape(N, C, HW)          # free reshape, no data movement
    w1t = jnp.transpose(w1)               # (C, Cm): avoids in-kernel transposes

    def _compiler(dims):
        return pltpu.CompilerParams(dimension_semantics=dims,
                                    vmem_limit_bytes=vmem_limit_bytes)

    # ---------------- fused path: one HBM read + one write of x ----------------
    # Footprint: double-buffered in + out image blocks + f32 pooling temp.
    fused_footprint = C * HW * (4 * itemsize + 4) + 4 * C * Cm * 4
    if not force_two_pass and fused_footprint <= int(0.6 * vmem_limit_bytes):
        out_flat = pl.pallas_call(
            functools.partial(_fused_kernel, hw=HW),
            out_shape=jax.ShapeDtypeStruct((N, C, HW), x.dtype),
            grid_spec=pltpu.PrefetchScalarGridSpec(
                num_scalar_prefetch=0,
                grid=(N,),
                in_specs=[
                    pl.BlockSpec((1, C, HW), lambda n: (n, 0, 0)),
                    pl.BlockSpec((C, Cm), lambda n: (0, 0)),
                    pl.BlockSpec((C, Cm), lambda n: (0, 0)),
                ],
                out_specs=pl.BlockSpec((1, C, HW), lambda n: (n, 0, 0)),
            ),
            compiler_params=_compiler(("parallel",)),
            cost_estimate=pl.CostEstimate(
                flops=2 * N * C * HW + 4 * N * C * Cm,
                transcendentals=N * C,
                bytes_accessed=2 * N * C * HW * itemsize + 2 * C * Cm * 4),
        )(x_flat, w1t, w2)
        return out_flat.reshape(N, C, H, W)

    # ---------------- fallback: two memory-bound passes, no padding ------------
    # Lane-dense tile (multiple of 128), ~tile_bytes of input per grid step.
    # TODO(synk): for extremely wide C (C*128*itemsize*4 > VMEM limit) split C
    # across an extra grid axis instead of flooring lanes at 128.
    lanes = max(128, ((tile_bytes // (C * itemsize)) // 128) * 128)
    tile = int(min(lanes, -(-HW // 128) * 128))
    n_t = -(-HW // tile)                 # cdiv; last tile may be ragged

    # pass 1: per-(N, C) spatial sum.
    pooled_sum = pl.pallas_call(
        functools.partial(_pool_kernel, hw=HW, tile=tile),
        out_shape=jax.ShapeDtypeStruct((N, C, 1), jnp.float32),
        grid_spec=pltpu.PrefetchScalarGridSpec(
            num_scalar_prefetch=0,
            grid=(N, n_t),
            in_specs=[pl.BlockSpec((1, C, tile), lambda n, t: (n, 0, t))],
            out_specs=pl.BlockSpec((1, C, 1), lambda n, t: (n, 0, 0)),
        ),
        compiler_params=_compiler(("parallel", "arbitrary")),
        cost_estimate=pl.CostEstimate(
            flops=N * C * HW, transcendentals=0,
            bytes_accessed=N * C * HW * itemsize + N * C * 4),
    )(x_flat)

    # Tiny squeeze/excite FC math, batched across N in plain JAX.
    pooled = pooled_sum[:, :, 0] * (1.0 / HW)                       # (N, C)
    h = jnp.maximum(pooled @ w1.astype(jnp.float32).T, 0.0)        # (N, Cm)
    s = jax.nn.sigmoid(h @ w2.astype(jnp.float32).T)[:, :, None]   # (N, C, 1)

    # pass 2: channel-wise rescale, both axes parallel (megacore-friendly).
    out_flat = pl.pallas_call(
        _rescale_kernel,
        out_shape=jax.ShapeDtypeStruct((N, C, HW), x.dtype),
        grid_spec=pltpu.PrefetchScalarGridSpec(
            num_scalar_prefetch=0,
            grid=(N, n_t),
            in_specs=[
                pl.BlockSpec((1, C, tile), lambda n, t: (n, 0, t)),
                pl.BlockSpec((1, C, 1), lambda n, t: (n, 0, 0)),
            ],
            out_specs=pl.BlockSpec((1, C, tile), lambda n, t: (n, 0, t)),
        ),
        compiler_params=_compiler(("parallel", "parallel")),
        cost_estimate=pl.CostEstimate(
            flops=N * C * HW, transcendentals=0,
            bytes_accessed=2 * N * C * HW * itemsize + N * C * 4),
    )(x_flat, s)

    return out_flat.reshape(N, C, H, W)


# ----------------------------- reference & test --------------------------------


def se_reference(x, w1, w2):
    pooled = jnp.mean(x, axis=(2, 3))                      # (N, C)
    h = jnp.maximum(pooled @ w1.T, 0.0)                    # (N, Cm)
    s = jax.nn.sigmoid(h @ w2.T)                           # (N, C)
    return x * s[:, :, None, None]


if __name__ == "__main__":
    key = jax.random.PRNGKey(0)
    kx, k1, k2, kx2 = jax.random.split(key, 4)

    # channels=4, reduction=2 -> mid channels = 2
    N, C, H, W = 2, 4, 16, 16
    Cm = C // 2
    x = jax.random.normal(kx, (N, C, H, W), dtype=jnp.float32)
    w1 = jax.random.normal(k1, (Cm, C), dtype=jnp.float32) * 0.5   # fc1 weight (1x1 conv, squeezed)
    w2 = jax.random.normal(k2, (C, Cm), dtype=jnp.float32) * 0.5   # fc2 weight (1x1 conv, squeezed)

    # Fused single-pass path (the common case).
    se_fused = jax.jit(se_module)
    out = jax.block_until_ready(se_fused(x, w1, w2))
    ref = se_reference(x, w1, w2)
    assert out.shape == (N, C, H, W)
    assert jnp.allclose(out, ref, atol=1e-5, rtol=1e-5), "fused path mismatch"

    # Fallback two-pass path with a ragged HW tile (HW=169, tile=128).
    x2 = jax.random.normal(kx2, (N, C, 13, 13), dtype=jnp.float32)
    se_2pass = jax.jit(functools.partial(se_module, force_two_pass=True, tile_bytes=1))
    out2 = jax.block_until_ready(se_2pass(x2, w1, w2))
    ref2 = se_reference(x2, w1, w2)
    assert out2.shape == x2.shape
    assert jnp.allclose(out2, ref2, atol=1e-5, rtol=1e-5), "two-pass path mismatch"

    print("KERNEL_OK")
</pallas_src>

<mosaic_0001>
module attributes {stable_mosaic.version = 11 : i64} {
  func.func @_fused_kernel(%arg0: i32, %arg1: memref<1x4x256xf32, #tpu.memory_space<vmem>>, %arg2: memref<4x2xf32, #tpu.memory_space<vmem>>, %arg3: memref<4x2xf32, #tpu.memory_space<vmem>>, %arg4: memref<1x4x256xf32, #tpu.memory_space<vmem>>) attributes {dimension_semantics = [#tpu.dimension_semantics<parallel>], iteration_bounds = array<i64: 2>, scalar_prefetch = 0 : i64, scratch_operands = 0 : i64, tpu.core_type = #tpu.core_type<tc>, window_params = [{transform_indices = @transform_0, window_bounds = array<i64: 1, 4, 256>}, {pipeline_mode = #tpu.pipeline_mode<synchronous>, transform_indices = @transform_1, window_bounds = array<i64: 4, 2>}, {pipeline_mode = #tpu.pipeline_mode<synchronous>, transform_indices = @transform_2, window_bounds = array<i64: 4, 2>}, {transform_indices = @transform_3, window_bounds = array<i64: 1, 4, 256>}]} {
    %c0 = arith.constant 0 : index
    %c0_0 = arith.constant 0 : index
    %c0_1 = arith.constant 0 : index
    %0 = vector.load %arg1[%c0, %c0_0, %c0_1] : memref<1x4x256xf32, #tpu.memory_space<vmem>>, vector<1x4x256xf32>
    %cst = arith.constant dense<0.000000e+00> : vector<1x4xf32>
    %1 = vector.multi_reduction <add>, %0, %cst [2] : vector<1x4x256xf32> to vector<1x4xf32>
    %2 = vector.shape_cast %1 : vector<1x4xf32> to vector<1x4x1xf32>
    %3 = vector.shape_cast %2 : vector<1x4x1xf32> to vector<4x1xf32>
    %cst_2 = arith.constant 3.906250e-03 : f32
    %4 = vector.broadcast %cst_2 : f32 to vector<4x1xf32>
    %5 = arith.mulf %3, %4 : vector<4x1xf32>
    %c0_3 = arith.constant 0 : index
    %c0_4 = arith.constant 0 : index
    %6 = vector.load %arg2[%c0_3, %c0_4] : memref<4x2xf32, #tpu.memory_space<vmem>>, vector<4x2xf32>
    %7 = vector.broadcast %5 : vector<4x1xf32> to vector<4x2xf32>
    %8 = arith.mulf %6, %7 : vector<4x2xf32>
    %cst_5 = arith.constant dense<0.000000e+00> : vector<2xf32>
    %9 = vector.multi_reduction <add>, %8, %cst_5 [0] : vector<4x2xf32> to vector<2xf32>
    %10 = vector.shape_cast %9 : vector<2xf32> to vector<1x2xf32>
    %cst_6 = arith.constant 0.000000e+00 : f32
    %11 = vector.broadcast %cst_6 : f32 to vector<1x2xf32>
    %12 = arith.maximumf %10, %11 : vector<1x2xf32>
    %c0_7 = arith.constant 0 : index
    %c0_8 = arith.constant 0 : index
    %13 = vector.load %arg3[%c0_7, %c0_8] : memref<4x2xf32, #tpu.memory_space<vmem>>, vector<4x2xf32>
    %14 = vector.broadcast %12 : vector<1x2xf32> to vector<4x2xf32>
    %15 = arith.mulf %13, %14 : vector<4x2xf32>
    %cst_9 = arith.constant dense<0.000000e+00> : vector<4xf32>
    %16 = vector.multi_reduction <add>, %15, %cst_9 [1] : vector<4x2xf32> to vector<4xf32>
    %17 = vector.shape_cast %16 : vector<4xf32> to vector<4x1xf32>
    %cst_10 = arith.constant 0.000000e+00 : f32
    %18 = vector.broadcast %cst_10 : f32 to vector<4x1xf32>
    %19 = arith.subf %18, %17 : vector<4x1xf32>
    %20 = math.exp %19 : vector<4x1xf32>
    %cst_11 = arith.constant 1.000000e+00 : f32
    %21 = vector.broadcast %cst_11 : f32 to vector<4x1xf32>
    %22 = arith.addf %21, %20 : vector<4x1xf32>
    %cst_12 = arith.constant 1.000000e+00 : f32
    %23 = vector.broadcast %cst_12 : f32 to vector<4x1xf32>
    %24 = arith.divf %23, %22 : vector<4x1xf32>
    %25 = vector.shape_cast %24 : vector<4x1xf32> to vector<1x4x1xf32>
    %26 = vector.broadcast %25 : vector<1x4x1xf32> to vector<1x4x256xf32>
    %27 = arith.mulf %0, %26 : vector<1x4x256xf32>
    %c0_13 = arith.constant 0 : index
    %c0_14 = arith.constant 0 : index
    %c0_15 = arith.constant 0 : index
    %28 = vector.load %arg4[%c0_13, %c0_14, %c0_15] : memref<1x4x256xf32, #tpu.memory_space<vmem>>, vector<1x4x256xf32>
    tpu.vector_store %arg4[%c0_13, %c0_14, %c0_15], %27 {strides = array<i32>} : memref<1x4x256xf32, #tpu.memory_space<vmem>>, vector<1x4x256xf32>,
    return
  }
  func.func @transform_0(%arg0: i32) -> (i32, i32, i32) {
    %c0_i32 = arith.constant 0 : i32
    %c0_i32_0 = arith.constant 0 : i32
    %c0_i32_1 = arith.constant 0 : i32
    return %arg0, %c0_i32, %c0_i32_0 : i32, i32, i32
  }
  func.func @transform_1(%arg0: i32) -> (i32, i32) {
    %c0_i32 = arith.constant 0 : i32
    %c0_i32_0 = arith.constant 0 : i32
    %c0_i32_1 = arith.constant 0 : i32
    return %c0_i32, %c0_i32_0 : i32, i32
  }
  func.func @transform_2(%arg0: i32) -> (i32, i32) {
    %c0_i32 = arith.constant 0 : i32
    %c0_i32_0 = arith.constant 0 : i32
    %c0_i32_1 = arith.constant 0 : i32
    return %c0_i32, %c0_i32_0 : i32, i32
  }
  func.func @transform_3(%arg0: i32) -> (i32, i32, i32) {
    %c0_i32 = arith.constant 0 : i32
    %c0_i32_0 = arith.constant 0 : i32
    %c0_i32_1 = arith.constant 0 : i32
    return %arg0, %c0_i32, %c0_i32_0 : i32, i32, i32
  }
}

</mosaic_0001>

<llo_original>
// kernel: se_module.1
$region0: #{se_module.1}
  #allocation0 [shape = 'u32[]', space=smem, size = 0x4, offset = 0x4, fixed_abs, tag = 'smem constant byte address 0x4 - core index']
  #allocation1 [shape = 'u32[72,128]{1,0:T(1,128)}', space=vmem, size = 0x9000, scoped, tag = 'internal scratch']
  %s0 = inlined_call_operand.vmem [shape: f32[2,4,256], index: 0, kind: input, shape index: {}]
  %s1 = inlined_call_operand.vmem [shape: f32[4,2], index: 1, kind: input, shape index: {}]
  %s2 = inlined_call_operand.vmem [shape: f32[4,2], index: 2, kind: input, shape index: {}]
  %s3 = inlined_call_operand.vmem [shape: f32[2,4,256], index: 3, kind: output, shape index: {}]
  %s4 = sld [smem:[#allocation0]]
  $region45: #{se_module.1} parent=0
    _
  %s6 = ssub.s32 1, %s4
  %s7 = scalar_select 0, %s6, %s4
  loop: start=0, step=1, limit=4
  $region2: #{se_module.1} parent=0 // loop_pre_header
    _
  $region3: #{se_module.1} parent=0 // loop_header
    %s9 = sphi 0, %s13
    %p10 = scmp.ge.s32.totalorder %s9, 4
    %s19 = sphi 0, %s21
    %s22 = sphi 0, %s19
    %s23 = sphi 0, %s22
    %s39 = sphi 0, %s23
    %s43 = sphi 0, %s43
    %s45 = sphi 0, %s43
    %s46 = sphi 0, %s45
    %s60 = sphi 0, %s46
    %s64 = sphi 0, %s64
    %s66 = sphi 0, %s64
    %s67 = sphi 0, %s66
    %s81 = sphi 0, %s67
    %s87 = sphi 0, %s89
    %s90 = sphi 0, %s87
    %s91 = sphi 0, %s90
    %s107 = sphi 0, %s91
  $region4: #{se_module.1} parent=0 // loop_header_branch
    %12 = sbr.rel (%p10) target = $region8
  $region5: #{se_module.1} parent=0 // loop_body
    %s14 = ssub.s32 %s9, 1
    %s15 = ssub.s32 %s9, 2
    %s16 = sadd.s32 %s9, 1
    %s17 = ssub.s32 %s9, %s16
    %p18 = scmp.eq.s32.totalorder %s17, 0
    %s20 = sadd.s32 %s19, 1
    %s21 = scalar_select %p18, %s19, %s20
    %p24 = pneg %p18
    %p25 = scmp.eq.s32.totalorder %s9, 1
    %p26 = por %p24, %p25
    %p27 = scmp.ne.s32.totalorder %s19, %s22
    %p28 = scmp.eq.s32.totalorder %s9, 0
    %p29 = por %p27, %p28
    %p30 = scmp.ne.s32.totalorder %s19, %s22
    %p31 = scmp.eq.s32.totalorder %s14, 1
    %p32 = por %p30, %p31
    %p33 = scmp.ne.s32.totalorder %s22, %s23
    %p34 = scmp.eq.s32.totalorder %s14, 0
    %p35 = por %p33, %p34
    %p36 = scmp.ne.s32.totalorder %s22, %s23
    %p37 = scmp.eq.s32.totalorder %s15, 1
    %p38 = por %p36, %p37
    %p40 = scmp.ne.s32.totalorder %s23, %s39
    %p41 = scmp.eq.s32.totalorder %s15, 0
    %p42 = por %p40, %p41
    %s44 = sadd.s32 %s43, 1
    %p47 = scmp.eq.s32.totalorder %s9, 1
    %p48 = scmp.ne.s32.totalorder %s43, %s45
    %p49 = scmp.eq.s32.totalorder %s9, 0
    %p50 = por %p48, %p49
    %p51 = scmp.ne.s32.totalorder %s43, %s45
    %p52 = scmp.eq.s32.totalorder %s14, 1
    %p53 = por %p51, %p52
    %p54 = scmp.ne.s32.totalorder %s45, %s46
    %p55 = scmp.eq.s32.totalorder %s14, 0
    %p56 = por %p54, %p55
    %p57 = scmp.ne.s32.totalorder %s45, %s46
    %p58 = scmp.eq.s32.totalorder %s15, 1
    %p59 = por %p57, %p58
    %p61 = scmp.ne.s32.totalorder %s46, %s60
    %p62 = scmp.eq.s32.totalorder %s15, 0
    %p63 = por %p61, %p62
    %s65 = sadd.s32 %s64, 1
    %p68 = scmp.eq.s32.totalorder %s9, 1
    %p69 = scmp.ne.s32.totalorder %s64, %s66
    %p70 = scmp.eq.s32.totalorder %s9, 0
    %p71 = por %p69, %p70
    %p72 = scmp.ne.s32.totalorder %s64, %s66
    %p73 = scmp.eq.s32.totalorder %s14, 1
    %p74 = por %p72, %p73
    %p75 = scmp.ne.s32.totalorder %s66, %s67
    %p76 = scmp.eq.s32.totalorder %s14, 0
    %p77 = por %p75, %p76
    %p78 = scmp.ne.s32.totalorder %s66, %s67
    %p79 = scmp.eq.s32.totalorder %s15, 1
    %p80 = por %p78, %p79
    %p82 = scmp.ne.s32.totalorder %s67, %s81
    %p83 = scmp.eq.s32.totalorder %s15, 0
    %p84 = por %p82, %p83
    %s85 = ssub.s32 %s9, %s16
    %p86 = scmp.eq.s32.totalorder %s85, 0
    %s88 = sadd.s32 %s87, 1
    %s89 = scalar_select %p86, %s87, %s88
    %p92 = pneg %p86
    %p93 = scmp.eq.s32.totalorder %s9, 1
    %p94 = por %p92, %p93
    %p95 = scmp.ne.s32.totalorder %s87, %s90
    %p96 = scmp.eq.s32.totalorder %s9, 0
    %p97 = por %p95, %p96
    %p98 = scmp.ne.s32.totalorder %s87, %s90
    %p99 = scmp.eq.s32.totalorder %s14, 1
    %p100 = por %p98, %p99
    %p101 = scmp.ne.s32.totalorder %s90, %s91
    %p102 = scmp.eq.s32.totalorder %s14, 0
    %p103 = por %p101, %p102
    %p104 = scmp.ne.s32.totalorder %s90, %s91
    %p105 = scmp.eq.s32.totalorder %s15, 1
    %p106 = por %p104, %p105
    %p108 = scmp.ne.s32.totalorder %s91, %s107
    %p109 = scmp.eq.s32.totalorder %s15, 0
    %p110 = por %p108, %p109
    %p111 = scmp.le.s32.totalorder 1, %s9
    %p112 = scmp.lt.s32.totalorder %s9, 3
    %p113 = pnand %p111, %p112
    %p114 = pneg %p113
    // Predicated region
    $region9: #{se_module.1} parent=5 // pred_check
      _
    $region10: #{se_module.1} parent=5 // pred_check_branch
      %116 = sbr.rel (%p113) target = $region12
    $region11: #{se_module.1} parent=5 // pred_region
      %s117 = ssub.s32 %s9, 1
      // Predicated region
      $region13: #{se_module.1} parent=11 // pred_check
        %p118 = pneg %p56
      $region14: #{se_module.1} parent=11 // pred_check_branch
        %120 = sbr.rel (%p118) target = $region16
      $region15: #{se_module.1} parent=11 // pred_region
        _
      $region16: #{se_module.1} parent=11 // pred_fallthru
        _
      // Predicated region
      $region17: #{se_module.1} parent=11 // pred_check
        %p121 = pneg %p77
      $region18: #{se_module.1} parent=11 // pred_check_branch
        %123 = sbr.rel (%p121) target = $region20
      $region19: #{se_module.1} parent=11 // pred_region
        _
      $region20: #{se_module.1} parent=11 // pred_fallthru
        _
    $region12: #{se_module.1} parent=5 // pred_fallthru
      _
    %p124 = scmp.lt.s32.totalorder %s9, 2
    // Predicated region
    $region21: #{se_module.1} parent=5 // pred_check
      %p125 = pneg %p124
    $region22: #{se_module.1} parent=5 // pred_check_branch
      %127 = sbr.rel (%p125) target = $region24
    $region23: #{se_module.1} parent=5 // pred_region
      // Predicated region
      $region25: #{se_module.1} parent=23 // pred_check
        %p128 = pneg %p29
      $region26: #{se_module.1} parent=23 // pred_check_branch
        %130 = sbr.rel (%p128) target = $region28
      $region27: #{se_module.1} parent=23 // pred_region
        %p131 = scmp.lt.s32.totalorder %s9, 1
        %s132 = scalar_select %p131, %s9, 1
        %s133 = smul.addr %s132, 2
        %s134 = smul.addr %s133, 4
        %s135 = scalar_lea.vmem %s0, %s134
      $region28: #{se_module.1} parent=23 // pred_fallthru
        _
    $region24: #{se_module.1} parent=5 // pred_fallthru
      _
    %p136 = scmp.le.s32.totalorder 1, %s9
    %p137 = scmp.lt.s32.totalorder %s9, 3
    %p138 = pnand %p136, %p137
    %p139 = pneg %p138
    // Predicated region
    $region29: #{se_module.1} parent=5 // pred_check
      _
    $region30: #{se_module.1} parent=5 // pred_check_branch
      %141 = sbr.rel (%p138) target = $region32
    $region31: #{se_module.1} parent=5 // pred_region
      %s142 = ssub.s32 %s9, 1
      %p143 = scmp.lt.s32.totalorder %s14, 1
      %s144 = scalar_select %p143, %s14, 1
      %s145 = smul.addr %s144, 2
      %s146 = smul.addr %s145, 4
      %s147 = scalar_lea.vmem %s0, %s146
      %p148 = pneg %p35
      %p149 = pneg %p32
      %p150 = pneg %p56
      %p151 = pneg %p53
      %p152 = pneg %p77
      %p153 = pneg %p74
      %p154 = pneg %p103
      %p155 = pneg %p100
      %p156 = scmp.lt.s32.totalorder %s14, 1
      %s157 = scalar_select %p156, %s14, 1
      %s158 = smul.addr %s157, 2
      %s159 = smul.addr %s158, 4
      %s160 = scalar_lea.vmem %s3, %s159
      %p161 = scmp.lt.s32.totalorder %s14, 1
      %s162 = scalar_select %p161, %s14, 1
      %s163 = smul.addr %s162, 2
      %s164 = smul.addr %s163, 4
      %s165 = scalar_lea.vmem %s0, %s164
      %p166 = scmp.lt.s32.totalorder %s14, 1
      %s167 = scalar_select %p166, %s14, 1
      %s168 = smul.addr %s167, 2
      %s169 = smul.addr %s168, 4
      %s170 = scalar_lea.vmem %s3, %s169
      %v171 = vld [vmem:[%s165] sm:$0xff]
      %173 = vst [vmem:[#allocation1] ss:$2 sm:$0xff] %v171
      %v174 = vld.sshfl [vmem:[#allocation1] sm:$0xff pattern:$0x75316420]
      %v175 = vld.sshfl [vmem:[#allocation1 + $0x8] sm:$0xff pattern:$0x75316420]
      %vm178 = vcmask 1043456
      %v179 = vsel %vm178, %v174, 0.0
      %v180 = vsel %vm178, %v175, 0.0
      %v181 = vadd.f32 %v179, %v180
      %182 = vadd.xlane.f32.xlu0 %v181
      %v183 = vpop.xlane.xlu0 %182
      %v184 = vmul.f32 %v183, 0.00390625
      %v185 = vld [vmem:[%s1] sm:$0xf]
      %v186 = vmul.f32 %v185, %v184
      %vm187 = vcmask 11264
      %v188 = vsel %vm187, %v186, 0.0
      %v189 = vrot.slane %v188, 4
      %v190 = vadd.f32 %v188, %v189
      %v191 = vrot.slane %v190, 2
      %v192 = vadd.f32 %v190, %v191
      %v193 = vrot.slane %v192, 1
      %v194 = vadd.f32 %v192, %v193
      %v195 = vmax.f32 %v194, 0.0
      %v196 = vld [vmem:[%s2] sm:$0xf]
      %v197 = vmul.f32 %v196, %v195
      %v198 = vsel %vm187, %v197, 0.0
      %199 = vadd.xlane.f32.xlu0 %v198
      %v200 = vpop.xlane.xlu0 %199
      %v201 = vsub.f32 0.0, %v200
      %v202 = vmul.f32 %v201, 1.442695
      %v203 = vpow.pop %v202
      %v204 = vadd.f32 %v203, 1.0
      %v205 = vrcp.pop %v204
      %v206 = vmul.f32 %v204, %v205
      %v207 = vsub.f32 1.0, %v206
      %v208 = vmul.f32 %v205, %v207
      %v209 = vadd.f32 %v205, %v208
      %vm210 = vweird.f32 %v204
      %vm211 = vweird.f32 %v205
      %vm212 = vmor %vm210, %vm211
      %v213 = vsel %vm212, %v205, %v209
      %v214 = vand.u32 2147483647, %v204
      %vm215 = vcmp.eq.f32.partialorder %v214, 8.507059e+37
      %v216 = vand.u32 %v204, 2147483648
      %v217 = vor.u32 1.1754944e-38, %v216
      %v218 = vsel %vm215, %v217, %v213
      %v219 = vmul.f32 1.0, %v218
      %v222 = vunpack.c.l.s4 839922192
      %v223 = vunpack.c.0.s8 %v222
      %v224 = vperm.slane %v219, %v223
      %v226 = vmul.f32 %v171, %v224
      %227 = vst [vmem:[%s170] sm:$0xff] %v226
      %p228 = scmp.lt.s32.totalorder %s14, 1
      %s229 = scalar_select %p228, %s14, 1
      %s230 = smul.addr %s229, 2
      %s231 = smul.addr %s230, 4
      %s232 = scalar_lea.vmem %s3, %s231
      // Predicated region
      $region33: #{se_module.1} parent=31 // pred_check
        %p233 = pneg %p100
      $region34: #{se_module.1} parent=31 // pred_check_branch
        %235 = sbr.rel (%p233) target = $region36
      $region35: #{se_module.1} parent=31 // pred_region
        _
      $region36: #{se_module.1} parent=31 // pred_fallthru
        _
    $region32: #{se_module.1} parent=5 // pred_fallthru
      _
    %p236 = scmp.le.s32.totalorder 2, %s9
    // Predicated region
    $region37: #{se_module.1} parent=5 // pred_check
      %p237 = pneg %p236
    $region38: #{se_module.1} parent=5 // pred_check_branch
      %239 = sbr.rel (%p237) target = $region40
    $region39: #{se_module.1} parent=5 // pred_region
      %s240 = ssub.s32 %s9, 2
      // Predicated region
      $region41: #{se_module.1} parent=39 // pred_check
        %p241 = pneg %p106
      $region42: #{se_module.1} parent=39 // pred_check_branch
        %243 = sbr.rel (%p241) target = $region44
      $region43: #{se_module.1} parent=39 // pred_region
        %p244 = scmp.lt.s32.totalorder %s15, 1
        %s245 = scalar_select %p244, %s15, 1
        %s246 = smul.addr %s245, 2
        %s247 = smul.addr %s246, 4
        %s248 = scalar_lea.vmem %s3, %s247
      $region44: #{se_module.1} parent=39 // pred_fallthru
        _
    $region40: #{se_module.1} parent=5 // pred_fallthru
      _
  $region6: #{se_module.1} parent=0 // loop_footer
    %s13 = sadd.s32 1, %s9
  $region7: #{se_module.1} parent=0 // loop_footer_branch
    %8 = sbr.rel target = $region3
  $region8: #{se_module.1} parent=0 // loop_exit
    _

</llo_original>
